<compile_context>
chip_gen: v7x
topology: tpu7x:2x2x1
jax: 0.10.0
libtpu: 0.0.40
codegen_flags: <defaults>
</compile_context>

<pallas_src>
import functools

import jax
import jax.numpy as jnp
from jax.experimental import pallas as pl
from jax.experimental.pallas import tpu as pltpu

_LANE = 128


def _cdiv(a, b):
    return -(-a // b)


def _dc_ce_kernel(x_ref, t_ref, out_ref, acc_ref, *, C, ts, n_real,
                  tiles_per_split, has_invalid):
    # x_ref:   (1, C, TS, 128) logits tile (native dtype, cast to f32 here)
    # t_ref:   (1, TS, 128)    integer label tile (int8 or int32)
    # out_ref: (1, 1, 4, C)    f32 rows = [tp, sum_p, cnt, ce]
    # acc_ref: (3*C + 1, 128)  f32 per-lane partial sums, rows:
    #            [0:C)     tp_c,  [C:2C) sum_p_c,  [2C:3C) cnt_c,  [3C] ce
    s_idx = pl.program_id(1)
    n_idx = pl.program_id(2)
    n_last = pl.num_programs(2) - 1

    @pl.when(n_idx == 0)
    def _init():
        acc_ref[...] = jnp.zeros_like(acc_ref)

    lab = t_ref[0, :, :].astype(jnp.int32)                     # (TS, 128)

    # Class slabs, pixels on sublanes+lanes -> full vreg occupancy on the VPU.
    z = [x_ref[0, c, :, :].astype(jnp.float32) for c in range(C)]

    # --- softmax over classes: elementwise max/sum trees (VPU), exp/log (EUP)
    m = z[0]
    for c in range(1, C):
        m = jnp.maximum(m, z[c])
    e = [jnp.exp(z[c] - m) for c in range(C)]
    s = e[0]
    for c in range(1, C):
        s = s + e[c]
    inv = pl.reciprocal(s, approx=True)                        # EUP slot
    inv = inv * (2.0 - s * inv)                                 # 1 Newton step
    lse = m + jnp.log(s)                                        # (TS, 128)

    if has_invalid:
        # Padded pixels (and duplicated clamp tiles) are masked here; logits in
        # those positions are well-defined zeros, so no NaN can appear upstream.
        base = (s_idx * tiles_per_split + n_idx) * (ts * _LANE)
        pix = (base
               + jax.lax.broadcasted_iota(jnp.int32, (ts, _LANE), 0) * _LANE
               + jax.lax.broadcasted_iota(jnp.int32, (ts, _LANE), 1))
        valid = pix < n_real
        valid_f = valid.astype(jnp.float32)
        inv = inv * valid_f                                     # p = 0 at pads
        lse = lse * valid_f                                     # no CE at pads
    else:
        valid = None

    # --- unrolled class loop: per-lane partial sums into aligned scratch ---
    zt = None                                                   # target logits
    for c in range(C):
        hit = lab == c
        if valid is not None:
            hit = jnp.logical_and(hit, valid)
        p_c = e[c] * inv
        acc_ref[c, :] += jnp.sum(jnp.where(hit, p_c, 0.0), axis=0)
        acc_ref[C + c, :] += jnp.sum(p_c, axis=0)
        acc_ref[2 * C + c, :] += jnp.sum(jnp.where(hit, 1.0, 0.0), axis=0)
        zt_c = jnp.where(hit, z[c], 0.0)
        zt = zt_c if zt is None else zt + zt_c

    acc_ref[3 * C, :] += jnp.sum(lse - zt, axis=0)              # CE partials

    # --- finalize: one cross-lane reduce + one fused output write per (b, s)
    @pl.when(n_idx == n_last)
    def _finalize():
        out_ref[0, 0, 0, :] = jnp.sum(acc_ref[0:C, :], axis=1)          # tp
        out_ref[0, 0, 1, :] = jnp.sum(acc_ref[C:2 * C, :], axis=1)      # sum_p
        out_ref[0, 0, 2, :] = jnp.sum(acc_ref[2 * C:3 * C, :], axis=1)  # cnt
        ce = jnp.sum(acc_ref[3 * C, :])
        out_ref[0, 0, 3, :] = jnp.broadcast_to(ce, (C,))                # ce


@functools.partial(jax.jit, static_argnames=("smooth",))
def dc_and_ce_loss(net_output, target, smooth=1.0):
    """Equivalent of DC_and_CE_loss(soft_dice_kwargs={}, ce_kwargs={}) forward.

    net_output: (B, C, H, W) float logits (NCHW)
    target:     (B, 1, H, W) or (B, H, W) integer label map
    """
    B, C, H, W = net_output.shape
    N = H * W

    x = net_output.reshape(B, C, N)                 # keep native dtype (bf16 ok)
    t = target.reshape(B, -1)                       # (B, N)

    # --- spatial tiling: pixels as (rows of 128 lanes) x sublane tile TS ---
    r0 = _cdiv(N, _LANE)                            # rows of 128 pixels
    ts_cap = max(8, (4096 // max(C, 1)) // 8 * 8)   # ~2 MiB f32 logits slab
    if ts_cap >= 32:
        ts_cap = ts_cap // 32 * 32                  # int8-label tile alignment
    if r0 <= ts_cap:
        ts, n_row_tiles = r0, 1                     # whole image in one block
    else:
        ts = ts_cap
        n_row_tiles = _cdiv(r0, ts)
    r_pad = n_row_tiles * ts
    n_pad = r_pad * _LANE

    # int8 labels (4x less HBM for the label stream) when safe.
    lab_dtype = jnp.int8 if (C <= 127 and ts % 32 == 0) else jnp.int32
    t = t.astype(lab_dtype)

    # Minimal padding (< one sublane-tile of pixels), fused with the re-layout
    # reshape; padded logits are zeros so in-kernel masking is NaN-safe.
    if n_pad != N:
        x = jnp.pad(x, ((0, 0), (0, 0), (0, n_pad - N)))
        t = jnp.pad(t, ((0, 0), (0, n_pad - N)))
    x = x.reshape(B, C, r_pad, _LANE)
    t = t.reshape(B, r_pad, _LANE)

    # Second parallel axis so both v7x TensorCores stay busy when B is odd/1.
    nsplit = 2 if (B % 2 == 1 and n_row_tiles >= 2) else 1
    tiles_per_split = _cdiv(n_row_tiles, nsplit)
    has_invalid = (nsplit * tiles_per_split * ts * _LANE) != N
    last_blk = n_row_tiles - 1
    need_clamp = nsplit * tiles_per_split > n_row_tiles

    def row_blk(s, n):
        blk = s * tiles_per_split + n
        if need_clamp:
            # Duplicated tiles read real (in-bounds) data; the in-kernel valid
            # mask (computed from the *logical* index) zeroes their contribution.
            blk = jnp.minimum(blk, last_blk)
        return blk

    stats = pl.pallas_call(
        functools.partial(_dc_ce_kernel, C=C, ts=ts, n_real=N,
                          tiles_per_split=tiles_per_split,
                          has_invalid=has_invalid),
        out_shape=jax.ShapeDtypeStruct((B, nsplit, 4, C), jnp.float32),
        grid_spec=pltpu.PrefetchScalarGridSpec(
            num_scalar_prefetch=0,
            grid=(B, nsplit, tiles_per_split),
            in_specs=[
                pl.BlockSpec((1, C, ts, _LANE),
                             lambda b, s, n: (b, 0, row_blk(s, n), 0)),
                pl.BlockSpec((1, ts, _LANE),
                             lambda b, s, n: (b, row_blk(s, n), 0)),
            ],
            out_specs=pl.BlockSpec((1, 1, 4, C),
                                   lambda b, s, n: (b, s, 0, 0)),
            scratch_shapes=[pltpu.VMEM((3 * C + 1, _LANE), jnp.float32)],
        ),
        compiler_params=pltpu.CompilerParams(
            dimension_semantics=("parallel", "parallel", "arbitrary"),
            vmem_limit_bytes=32 * 1024 * 1024),
    )(x, t)

    stats = jnp.sum(stats, axis=1)                  # merge split halves -> (B,4,C)
    tp = stats[:, 0, :]
    sp = stats[:, 1, :]
    cnt = stats[:, 2, :]
    ce_sum = stats[:, 3, 0]

    fp = sp - tp                                    # sum p*(1-y)
    fn = cnt - tp                                   # sum (1-p)*y

    # Soft dice (batch_dice=False, do_bg=True, square=False)
    dc = (2.0 * tp + smooth) / (2.0 * tp + fp + fn + smooth)   # (B, C)
    dice_loss = -jnp.mean(dc)

    # CrossentropyND: mean per-pixel CE over all B*H*W pixels
    ce_loss = jnp.sum(ce_sum) / (B * N)

    # aggregate == 'sum'
    return ce_loss + dice_loss


def _reference(net_output, target, smooth=1.0):
    """Plain-JAX reference of the PyTorch forward, for verification."""
    B, C, H, W = net_output.shape
    x = net_output.astype(jnp.float32)
    t = target.reshape(B, H, W).astype(jnp.int32)
    p = jax.nn.softmax(x, axis=1)
    y = jax.nn.one_hot(t, C, axis=1, dtype=jnp.float32)        # (B, C, H, W)
    tp = jnp.sum(p * y, axis=(2, 3))
    fp = jnp.sum(p * (1.0 - y), axis=(2, 3))
    fn = jnp.sum((1.0 - p) * y, axis=(2, 3))
    dc = (2.0 * tp + smooth) / (2.0 * tp + fp + fn + smooth)
    dice_loss = -jnp.mean(dc)
    logp = jax.nn.log_softmax(x, axis=1)
    ce = -jnp.mean(jnp.sum(logp * y, axis=1))
    return ce + dice_loss


if __name__ == "__main__":
    key = jax.random.PRNGKey(0)
    k1, k2, k3, k4, k5, k6 = jax.random.split(key, 6)

    # Case 1: lane-aligned spatial size, f32 logits, single tile.
    B, C, H, W = 2, 4, 16, 16
    x1 = jax.random.normal(k1, (B, C, H, W), dtype=jnp.float32)
    t1 = jax.random.randint(k2, (B, 1, H, W), 0, C, dtype=jnp.int32)
    l1 = jax.block_until_ready(dc_and_ce_loss(x1, t1))
    r1 = _reference(x1, t1)
    assert jnp.allclose(l1, r1, rtol=1e-4, atol=1e-4), (l1, r1)

    # Case 2: non-aligned spatial size exercises the padding / valid-mask path.
    x2 = jax.random.normal(k3, (2, 4, 10, 10), dtype=jnp.float32)
    t2 = jax.random.randint(k4, (2, 1, 10, 10), 0, 4, dtype=jnp.int32)
    l2 = jax.block_until_ready(dc_and_ce_loss(x2, t2))
    r2 = _reference(x2, t2)
    assert jnp.allclose(l2, r2, rtol=1e-4, atol=1e-4), (l2, r2)

    # Case 3: realistic size — bf16 logits, int8 labels, multi-tile
    # accumulation, and the 2-way spatial split (B=1) for v7x megacore.
    x3 = jax.random.normal(k5, (1, 8, 512, 512), dtype=jnp.bfloat16)
    t3 = jax.random.randint(k6, (1, 512, 512), 0, 8, dtype=jnp.int32)
    l3 = jax.block_until_ready(dc_and_ce_loss(x3, t3))
    r3 = _reference(x3, t3)
    assert jnp.allclose(l3, r3, rtol=1e-3, atol=1e-3), (l3, r3)

    print("KERNEL_OK")
</pallas_src>

<mosaic_0001>
module attributes {stable_mosaic.version = 11 : i64} {
  func.func @_dc_ce_kernel(%arg0: i32, %arg1: i32, %arg2: i32, %arg3: memref<1x4x2x128xf32, #tpu.memory_space<vmem>>, %arg4: memref<1x2x128xi32, #tpu.memory_space<vmem>>, %arg5: memref<1x1x4x4xf32, #tpu.memory_space<vmem>>, %arg6: memref<13x128xf32, #tpu.memory_space<vmem>>) attributes {dimension_semantics = [#tpu.dimension_semantics<parallel>, #tpu.dimension_semantics<parallel>, #tpu.dimension_semantics<arbitrary>], iteration_bounds = array<i64: 2, 1, 1>, scalar_prefetch = 0 : i64, scratch_operands = 1 : i64, tpu.core_type = #tpu.core_type<tc>, window_params = [{transform_indices = @transform_0, window_bounds = array<i64: 1, 4, 2, 128>}, {transform_indices = @transform_1, window_bounds = array<i64: 1, 2, 128>}, {transform_indices = @transform_2, window_bounds = array<i64: 1, 1, 4, 4>}]} {
    %c0_i32 = arith.constant 0 : i32
    %0 = arith.cmpi eq, %arg2, %c0_i32 : i32
    %1 = arith.extui %0 : i1 to i32
    %c0_i32_0 = arith.constant 0 : i32
    %2 = arith.cmpi ne, %1, %c0_i32_0 : i32
    scf.if %2 {
      %cst_91 = arith.constant 0.000000e+00 : f32
      %172 = vector.broadcast %cst_91 : f32 to vector<13x128xf32>
      %c0_92 = arith.constant 0 : index
      %c0_93 = arith.constant 0 : index
      %173 = vector.load %arg6[%c0_92, %c0_93] : memref<13x128xf32, #tpu.memory_space<vmem>>, vector<13x128xf32>
      tpu.vector_store %arg6[%c0_92, %c0_93], %172 {strides = array<i32>} : memref<13x128xf32, #tpu.memory_space<vmem>>, vector<13x128xf32>,
    } else {
    }
    %c0 = arith.constant 0 : index
    %c0_1 = arith.constant 0 : index
    %c0_2 = arith.constant 0 : index
    %3 = vector.load %arg4[%c0, %c0_1, %c0_2] : memref<1x2x128xi32, #tpu.memory_space<vmem>>, vector<1x2x128xi32>
    %4 = vector.shape_cast %3 : vector<1x2x128xi32> to vector<2x128xi32>
    %c0_3 = arith.constant 0 : index
    %c0_4 = arith.constant 0 : index
    %c0_5 = arith.constant 0 : index
    %c0_6 = arith.constant 0 : index
    %5 = vector.load %arg3[%c0_3, %c0_4, %c0_5, %c0_6] : memref<1x4x2x128xf32, #tpu.memory_space<vmem>>, vector<1x1x2x128xf32>
    %6 = vector.shape_cast %5 : vector<1x1x2x128xf32> to vector<2x128xf32>
    %c0_7 = arith.constant 0 : index
    %c1 = arith.constant 1 : index
    %c0_8 = arith.constant 0 : index
    %c0_9 = arith.constant 0 : index
    %7 = vector.load %arg3[%c0_7, %c1, %c0_8, %c0_9] : memref<1x4x2x128xf32, #tpu.memory_space<vmem>>, vector<1x1x2x128xf32>
    %8 = vector.shape_cast %7 : vector<1x1x2x128xf32> to vector<2x128xf32>
    %c0_10 = arith.constant 0 : index
    %c2 = arith.constant 2 : index
    %c0_11 = arith.constant 0 : index
    %c0_12 = arith.constant 0 : index
    %9 = vector.load %arg3[%c0_10, %c2, %c0_11, %c0_12] : memref<1x4x2x128xf32, #tpu.memory_space<vmem>>, vector<1x1x2x128xf32>
    %10 = vector.shape_cast %9 : vector<1x1x2x128xf32> to vector<2x128xf32>
    %c0_13 = arith.constant 0 : index
    %c3 = arith.constant 3 : index
    %c0_14 = arith.constant 0 : index
    %c0_15 = arith.constant 0 : index
    %11 = vector.load %arg3[%c0_13, %c3, %c0_14, %c0_15] : memref<1x4x2x128xf32, #tpu.memory_space<vmem>>, vector<1x1x2x128xf32>
    %12 = vector.shape_cast %11 : vector<1x1x2x128xf32> to vector<2x128xf32>
    %13 = arith.maximumf %6, %8 : vector<2x128xf32>
    %14 = arith.maximumf %13, %10 : vector<2x128xf32>
    %15 = arith.maximumf %14, %12 : vector<2x128xf32>
    %16 = arith.subf %6, %15 : vector<2x128xf32>
    %17 = math.exp %16 : vector<2x128xf32>
    %18 = arith.subf %8, %15 : vector<2x128xf32>
    %19 = math.exp %18 : vector<2x128xf32>
    %20 = arith.subf %10, %15 : vector<2x128xf32>
    %21 = math.exp %20 : vector<2x128xf32>
    %22 = arith.subf %12, %15 : vector<2x128xf32>
    %23 = math.exp %22 : vector<2x128xf32>
    %24 = arith.addf %17, %19 : vector<2x128xf32>
    %25 = arith.addf %24, %21 : vector<2x128xf32>
    %26 = arith.addf %25, %23 : vector<2x128xf32>
    %27 = tpu.reciprocal %26 {approx = true} : vector<2x128xf32> -> vector<2x128xf32>
    %28 = arith.mulf %26, %27 : vector<2x128xf32>
    %cst = arith.constant 2.000000e+00 : f32
    %29 = vector.broadcast %cst : f32 to vector<2x128xf32>
    %30 = arith.subf %29, %28 : vector<2x128xf32>
    %31 = arith.mulf %27, %30 : vector<2x128xf32>
    %32 = math.log %26 : vector<2x128xf32>
    %33 = arith.addf %15, %32 : vector<2x128xf32>
    %c0_i32_16 = arith.constant 0 : i32
    %34 = vector.broadcast %c0_i32_16 : i32 to vector<2x128xi32>
    %35 = arith.cmpi eq, %4, %34 : vector<2x128xi32>
    %36 = arith.mulf %17, %31 : vector<2x128xf32>
    %c0_17 = arith.constant 0 : index
    %c0_18 = arith.constant 0 : index
    %37 = vector.load %arg6[%c0_17, %c0_18] : memref<13x128xf32, #tpu.memory_space<vmem>>, vector<1x128xf32>
    %38 = vector.shape_cast %37 : vector<1x128xf32> to vector<128xf32>
    %cst_19 = arith.constant 0.000000e+00 : f32
    %39 = vector.broadcast %cst_19 : f32 to vector<2x128xf32>
    %40 = arith.select %35, %36, %39 : vector<2x128xi1>, vector<2x128xf32>
    %cst_20 = arith.constant dense<0.000000e+00> : vector<128xf32>
    %41 = vector.multi_reduction <add>, %40, %cst_20 [0] : vector<2x128xf32> to vector<128xf32>
    %42 = arith.addf %38, %41 : vector<128xf32>
    %c0_21 = arith.constant 0 : index
    %c0_22 = arith.constant 0 : index
    %43 = vector.load %arg6[%c0_21, %c0_22] : memref<13x128xf32, #tpu.memory_space<vmem>>, vector<1x128xf32>
    %44 = vector.shape_cast %43 : vector<1x128xf32> to vector<128xf32>
    %45 = vector.shape_cast %42 : vector<128xf32> to vector<1x128xf32>
    tpu.vector_store %arg6[%c0_21, %c0_22], %45 {strides = array<i32>} : memref<13x128xf32, #tpu.memory_space<vmem>>, vector<1x128xf32>,
    %c4 = arith.constant 4 : index
    %c0_23 = arith.constant 0 : index
    %46 = vector.load %arg6[%c4, %c0_23] : memref<13x128xf32, #tpu.memory_space<vmem>>, vector<1x128xf32>
    %47 = vector.shape_cast %46 : vector<1x128xf32> to vector<128xf32>
    %cst_24 = arith.constant dense<0.000000e+00> : vector<128xf32>
    %48 = vector.multi_reduction <add>, %36, %cst_24 [0] : vector<2x128xf32> to vector<128xf32>
    %49 = arith.addf %47, %48 : vector<128xf32>
    %c4_25 = arith.constant 4 : index
    %c0_26 = arith.constant 0 : index
    %50 = vector.load %arg6[%c4_25, %c0_26] : memref<13x128xf32, #tpu.memory_space<vmem>>, vector<1x128xf32>
    %51 = vector.shape_cast %50 : vector<1x128xf32> to vector<128xf32>
    %52 = vector.shape_cast %49 : vector<128xf32> to vector<1x128xf32>
    tpu.vector_store %arg6[%c4_25, %c0_26], %52 {strides = array<i32>} : memref<13x128xf32, #tpu.memory_space<vmem>>, vector<1x128xf32>,
    %c8 = arith.constant 8 : index
    %c0_27 = arith.constant 0 : index
    %53 = vector.load %arg6[%c8, %c0_27] : memref<13x128xf32, #tpu.memory_space<vmem>>, vector<1x128xf32>
    %54 = vector.shape_cast %53 : vector<1x128xf32> to vector<128xf32>
    %cst_28 = arith.constant 1.000000e+00 : f32
    %cst_29 = arith.constant 0.000000e+00 : f32
    %55 = vector.broadcast %cst_28 : f32 to vector<2x128xf32>
    %56 = vector.broadcast %cst_29 : f32 to vector<2x128xf32>
    %57 = arith.select %35, %55, %56 : vector<2x128xi1>, vector<2x128xf32>
    %cst_30 = arith.constant dense<0.000000e+00> : vector<128xf32>
    %58 = vector.multi_reduction <add>, %57, %cst_30 [0] : vector<2x128xf32> to vector<128xf32>
    %59 = arith.addf %54, %58 : vector<128xf32>
    %c8_31 = arith.constant 8 : index
    %c0_32 = arith.constant 0 : index
    %60 = vector.load %arg6[%c8_31, %c0_32] : memref<13x128xf32, #tpu.memory_space<vmem>>, vector<1x128xf32>
    %61 = vector.shape_cast %60 : vector<1x128xf32> to vector<128xf32>
    %62 = vector.shape_cast %59 : vector<128xf32> to vector<1x128xf32>
    tpu.vector_store %arg6[%c8_31, %c0_32], %62 {strides = array<i32>} : memref<13x128xf32, #tpu.memory_space<vmem>>, vector<1x128xf32>,
    %cst_33 = arith.constant 0.000000e+00 : f32
    %63 = vector.broadcast %cst_33 : f32 to vector<2x128xf32>
    %64 = arith.select %35, %6, %63 : vector<2x128xi1>, vector<2x128xf32>
    %c1_i32 = arith.constant 1 : i32
    %65 = vector.broadcast %c1_i32 : i32 to vector<2x128xi32>
    %66 = arith.cmpi eq, %4, %65 : vector<2x128xi32>
    %67 = arith.mulf %19, %31 : vector<2x128xf32>
    %c1_34 = arith.constant 1 : index
    %c0_35 = arith.constant 0 : index
    %68 = vector.load %arg6[%c1_34, %c0_35] : memref<13x128xf32, #tpu.memory_space<vmem>>, vector<1x128xf32>
    %69 = vector.shape_cast %68 : vector<1x128xf32> to vector<128xf32>
    %cst_36 = arith.constant 0.000000e+00 : f32
    %70 = vector.broadcast %cst_36 : f32 to vector<2x128xf32>
    %71 = arith.select %66, %67, %70 : vector<2x128xi1>, vector<2x128xf32>
    %cst_37 = arith.constant dense<0.000000e+00> : vector<128xf32>
    %72 = vector.multi_reduction <add>, %71, %cst_37 [0] : vector<2x128xf32> to vector<128xf32>
    %73 = arith.addf %69, %72 : vector<128xf32>
    %c1_38 = arith.constant 1 : index
    %c0_39 = arith.constant 0 : index
    %74 = vector.load %arg6[%c1_38, %c0_39] : memref<13x128xf32, #tpu.memory_space<vmem>>, vector<1x128xf32>
    %75 = vector.shape_cast %74 : vector<1x128xf32> to vector<128xf32>
    %76 = vector.shape_cast %73 : vector<128xf32> to vector<1x128xf32>
    tpu.vector_store %arg6[%c1_38, %c0_39], %76 {strides = array<i32>} : memref<13x128xf32, #tpu.memory_space<vmem>>, vector<1x128xf32>,
    %c5 = arith.constant 5 : index
    %c0_40 = arith.constant 0 : index
    %77 = vector.load %arg6[%c5, %c0_40] : memref<13x128xf32, #tpu.memory_space<vmem>>, vector<1x128xf32>
    %78 = vector.shape_cast %77 : vector<1x128xf32> to vector<128xf32>
    %cst_41 = arith.constant dense<0.000000e+00> : vector<128xf32>
    %79 = vector.multi_reduction <add>, %67, %cst_41 [0] : vector<2x128xf32> to vector<128xf32>
    %80 = arith.addf %78, %79 : vector<128xf32>
    %c5_42 = arith.constant 5 : index
    %c0_43 = arith.constant 0 : index
    %81 = vector.load %arg6[%c5_42, %c0_43] : memref<13x128xf32, #tpu.memory_space<vmem>>, vector<1x128xf32>
    %82 = vector.shape_cast %81 : vector<1x128xf32> to vector<128xf32>
    %83 = vector.shape_cast %80 : vector<128xf32> to vector<1x128xf32>
    tpu.vector_store %arg6[%c5_42, %c0_43], %83 {strides = array<i32>} : memref<13x128xf32, #tpu.memory_space<vmem>>, vector<1x128xf32>,
    %c9 = arith.constant 9 : index
    %c0_44 = arith.constant 0 : index
    %84 = vector.load %arg6[%c9, %c0_44] : memref<13x128xf32, #tpu.memory_space<vmem>>, vector<1x128xf32>
    %85 = vector.shape_cast %84 : vector<1x128xf32> to vector<128xf32>
    %cst_45 = arith.constant 1.000000e+00 : f32
    %cst_46 = arith.constant 0.000000e+00 : f32
    %86 = vector.broadcast %cst_45 : f32 to vector<2x128xf32>
    %87 = vector.broadcast %cst_46 : f32 to vector<2x128xf32>
    %88 = arith.select %66, %86, %87 : vector<2x128xi1>, vector<2x128xf32>
    %cst_47 = arith.constant dense<0.000000e+00> : vector<128xf32>
    %89 = vector.multi_reduction <add>, %88, %cst_47 [0] : vector<2x128xf32> to vector<128xf32>
    %90 = arith.addf %85, %89 : vector<128xf32>
    %c9_48 = arith.constant 9 : index
    %c0_49 = arith.constant 0 : index
    %91 = vector.load %arg6[%c9_48, %c0_49] : memref<13x128xf32, #tpu.memory_space<vmem>>, vector<1x128xf32>
    %92 = vector.shape_cast %91 : vector<1x128xf32> to vector<128xf32>
    %93 = vector.shape_cast %90 : vector<128xf32> to vector<1x128xf32>
    tpu.vector_store %arg6[%c9_48, %c0_49], %93 {strides = array<i32>} : memref<13x128xf32, #tpu.memory_space<vmem>>, vector<1x128xf32>,
    %cst_50 = arith.constant 0.000000e+00 : f32
    %94 = vector.broadcast %cst_50 : f32 to vector<2x128xf32>
    %95 = arith.select %66, %8, %94 : vector<2x128xi1>, vector<2x128xf32>
    %96 = arith.addf %64, %95 : vector<2x128xf32>
    %c2_i32 = arith.constant 2 : i32
    %97 = vector.broadcast %c2_i32 : i32 to vector<2x128xi32>
    %98 = arith.cmpi eq, %4, %97 : vector<2x128xi32>
    %99 = arith.mulf %21, %31 : vector<2x128xf32>
    %c2_51 = arith.constant 2 : index
    %c0_52 = arith.constant 0 : index
    %100 = vector.load %arg6[%c2_51, %c0_52] : memref<13x128xf32, #tpu.memory_space<vmem>>, vector<1x128xf32>
    %101 = vector.shape_cast %100 : vector<1x128xf32> to vector<128xf32>
    %cst_53 = arith.constant 0.000000e+00 : f32
    %102 = vector.broadcast %cst_53 : f32 to vector<2x128xf32>
    %103 = arith.select %98, %99, %102 : vector<2x128xi1>, vector<2x128xf32>
    %cst_54 = arith.constant dense<0.000000e+00> : vector<128xf32>
    %104 = vector.multi_reduction <add>, %103, %cst_54 [0] : vector<2x128xf32> to vector<128xf32>
    %105 = arith.addf %101, %104 : vector<128xf32>
    %c2_55 = arith.constant 2 : index
    %c0_56 = arith.constant 0 : index
    %106 = vector.load %arg6[%c2_55, %c0_56] : memref<13x128xf32, #tpu.memory_space<vmem>>, vector<1x128xf32>
    %107 = vector.shape_cast %106 : vector<1x128xf32> to vector<128xf32>
    %108 = vector.shape_cast %105 : vector<128xf32> to vector<1x128xf32>
    tpu.vector_store %arg6[%c2_55, %c0_56], %108 {strides = array<i32>} : memref<13x128xf32, #tpu.memory_space<vmem>>, vector<1x128xf32>,
    %c6 = arith.constant 6 : index
    %c0_57 = arith.constant 0 : index
    %109 = vector.load %arg6[%c6, %c0_57] : memref<13x128xf32, #tpu.memory_space<vmem>>, vector<1x128xf32>
    %110 = vector.shape_cast %109 : vector<1x128xf32> to vector<128xf32>
    %cst_58 = arith.constant dense<0.000000e+00> : vector<128xf32>
    %111 = vector.multi_reduction <add>, %99, %cst_58 [0] : vector<2x128xf32> to vector<128xf32>
    %112 = arith.addf %110, %111 : vector<128xf32>
    %c6_59 = arith.constant 6 : index
    %c0_60 = arith.constant 0 : index
    %113 = vector.load %arg6[%c6_59, %c0_60] : memref<13x128xf32, #tpu.memory_space<vmem>>, vector<1x128xf32>
    %114 = vector.shape_cast %113 : vector<1x128xf32> to vector<128xf32>
    %115 = vector.shape_cast %112 : vector<128xf32> to vector<1x128xf32>
    tpu.vector_store %arg6[%c6_59, %c0_60], %115 {strides = array<i32>} : memref<13x128xf32, #tpu.memory_space<vmem>>, vector<1x128xf32>,
    %c10 = arith.constant 10 : index
    %c0_61 = arith.constant 0 : index
    %116 = vector.load %arg6[%c10, %c0_61] : memref<13x128xf32, #tpu.memory_space<vmem>>, vector<1x128xf32>
    %117 = vector.shape_cast %116 : vector<1x128xf32> to vector<128xf32>
    %cst_62 = arith.constant 1.000000e+00 : f32
    %cst_63 = arith.constant 0.000000e+00 : f32
    %118 = vector.broadcast %cst_62 : f32 to vector<2x128xf32>
    %119 = vector.broadcast %cst_63 : f32 to vector<2x128xf32>
    %120 = arith.select %98, %118, %119 : vector<2x128xi1>, vector<2x128xf32>
    %cst_64 = arith.constant dense<0.000000e+00> : vector<128xf32>
    %121 = vector.multi_reduction <add>, %120, %cst_64 [0] : vector<2x128xf32> to vector<128xf32>
    %122 = arith.addf %117, %121 : vector<128xf32>
    %c10_65 = arith.constant 10 : index
    %c0_66 = arith.constant 0 : index
    %123 = vector.load %arg6[%c10_65, %c0_66] : memref<13x128xf32, #tpu.memory_space<vmem>>, vector<1x128xf32>
    %124 = vector.shape_cast %123 : vector<1x128xf32> to vector<128xf32>
    %125 = vector.shape_cast %122 : vector<128xf32> to vector<1x128xf32>
    tpu.vector_store %arg6[%c10_65, %c0_66], %125 {strides = array<i32>} : memref<13x128xf32, #tpu.memory_space<vmem>>, vector<1x128xf32>,
    %cst_67 = arith.constant 0.000000e+00 : f32
    %126 = vector.broadcast %cst_67 : f32 to vector<2x128xf32>
    %127 = arith.select %98, %10, %126 : vector<2x128xi1>, vector<2x128xf32>
    %128 = arith.addf %96, %127 : vector<2x128xf32>
    %c3_i32 = arith.constant 3 : i32
    %129 = vector.broadcast %c3_i32 : i32 to vector<2x128xi32>
    %130 = arith.cmpi eq, %4, %129 : vector<2x128xi32>
    %131 = arith.mulf %23, %31 : vector<2x128xf32>
    %c3_68 = arith.constant 3 : index
    %c0_69 = arith.constant 0 : index
    %132 = vector.load %arg6[%c3_68, %c0_69] : memref<13x128xf32, #tpu.memory_space<vmem>>, vector<1x128xf32>
    %133 = vector.shape_cast %132 : vector<1x128xf32> to vector<128xf32>
    %cst_70 = arith.constant 0.000000e+00 : f32
    %134 = vector.broadcast %cst_70 : f32 to vector<2x128xf32>
    %135 = arith.select %130, %131, %134 : vector<2x128xi1>, vector<2x128xf32>
    %cst_71 = arith.constant dense<0.000000e+00> : vector<128xf32>
    %136 = vector.multi_reduction <add>, %135, %cst_71 [0] : vector<2x128xf32> to vector<128xf32>
    %137 = arith.addf %133, %136 : vector<128xf32>
    %c3_72 = arith.constant 3 : index
    %c0_73 = arith.constant 0 : index
    %138 = vector.load %arg6[%c3_72, %c0_73] : memref<13x128xf32, #tpu.memory_space<vmem>>, vector<1x128xf32>
    %139 = vector.shape_cast %138 : vector<1x128xf32> to vector<128xf32>
    %140 = vector.shape_cast %137 : vector<128xf32> to vector<1x128xf32>
    tpu.vector_store %arg6[%c3_72, %c0_73], %140 {strides = array<i32>} : memref<13x128xf32, #tpu.memory_space<vmem>>, vector<1x128xf32>,
    %c7 = arith.constant 7 : index
    %c0_74 = arith.constant 0 : index
    %141 = vector.load %arg6[%c7, %c0_74] : memref<13x128xf32, #tpu.memory_space<vmem>>, vector<1x128xf32>
    %142 = vector.shape_cast %141 : vector<1x128xf32> to vector<128xf32>
    %cst_75 = arith.constant dense<0.000000e+00> : vector<128xf32>
    %143 = vector.multi_reduction <add>, %131, %cst_75 [0] : vector<2x128xf32> to vector<128xf32>
    %144 = arith.addf %142, %143 : vector<128xf32>
    %c7_76 = arith.constant 7 : index
    %c0_77 = arith.constant 0 : index
    %145 = vector.load %arg6[%c7_76, %c0_77] : memref<13x128xf32, #tpu.memory_space<vmem>>, vector<1x128xf32>
    %146 = vector.shape_cast %145 : vector<1x128xf32> to vector<128xf32>
    %147 = vector.shape_cast %144 : vector<128xf32> to vector<1x128xf32>
    tpu.vector_store %arg6[%c7_76, %c0_77], %147 {strides = array<i32>} : memref<13x128xf32, #tpu.memory_space<vmem>>, vector<1x128xf32>,
    %c11 = arith.constant 11 : index
    %c0_78 = arith.constant 0 : index
    %148 = vector.load %arg6[%c11, %c0_78] : memref<13x128xf32, #tpu.memory_space<vmem>>, vector<1x128xf32>
    %149 = vector.shape_cast %148 : vector<1x128xf32> to vector<128xf32>
    %cst_79 = arith.constant 1.000000e+00 : f32
    %cst_80 = arith.constant 0.000000e+00 : f32
    %150 = vector.broadcast %cst_79 : f32 to vector<2x128xf32>
    %151 = vector.broadcast %cst_80 : f32 to vector<2x128xf32>
    %152 = arith.select %130, %150, %151 : vector<2x128xi1>, vector<2x128xf32>
    %cst_81 = arith.constant dense<0.000000e+00> : vector<128xf32>
    %153 = vector.multi_reduction <add>, %152, %cst_81 [0] : vector<2x128xf32> to vector<128xf32>
    %154 = arith.addf %149, %153 : vector<128xf32>
    %c11_82 = arith.constant 11 : index
    %c0_83 = arith.constant 0 : index
    %155 = vector.load %arg6[%c11_82, %c0_83] : memref<13x128xf32, #tpu.memory_space<vmem>>, vector<1x128xf32>
    %156 = vector.shape_cast %155 : vector<1x128xf32> to vector<128xf32>
    %157 = vector.shape_cast %154 : vector<128xf32> to vector<1x128xf32>
    tpu.vector_store %arg6[%c11_82, %c0_83], %157 {strides = array<i32>} : memref<13x128xf32, #tpu.memory_space<vmem>>, vector<1x128xf32>,
    %cst_84 = arith.constant 0.000000e+00 : f32
    %158 = vector.broadcast %cst_84 : f32 to vector<2x128xf32>
    %159 = arith.select %130, %12, %158 : vector<2x128xi1>, vector<2x128xf32>
    %160 = arith.addf %128, %159 : vector<2x128xf32>
    %c12 = arith.constant 12 : index
    %c0_85 = arith.constant 0 : index
    %161 = vector.load %arg6[%c12, %c0_85] : memref<13x128xf32, #tpu.memory_space<vmem>>, vector<1x128xf32>
    %162 = vector.shape_cast %161 : vector<1x128xf32> to vector<128xf32>
    %163 = arith.subf %33, %160 : vector<2x128xf32>
    %cst_86 = arith.constant dense<0.000000e+00> : vector<128xf32>
    %164 = vector.multi_reduction <add>, %163, %cst_86 [0] : vector<2x128xf32> to vector<128xf32>
    %165 = arith.addf %162, %164 : vector<128xf32>
    %c12_87 = arith.constant 12 : index
    %c0_88 = arith.constant 0 : index
    %166 = vector.load %arg6[%c12_87, %c0_88] : memref<13x128xf32, #tpu.memory_space<vmem>>, vector<1x128xf32>
    %167 = vector.shape_cast %166 : vector<1x128xf32> to vector<128xf32>
    %168 = vector.shape_cast %165 : vector<128xf32> to vector<1x128xf32>
    tpu.vector_store %arg6[%c12_87, %c0_88], %168 {strides = array<i32>} : memref<13x128xf32, #tpu.memory_space<vmem>>, vector<1x128xf32>,
    %c0_i32_89 = arith.constant 0 : i32
    %169 = arith.cmpi eq, %arg2, %c0_i32_89 : i32
    %170 = arith.extui %169 : i1 to i32
    %c0_i32_90 = arith.constant 0 : i32
    %171 = arith.cmpi ne, %170, %c0_i32_90 : i32
    scf.if %171 {
      %c0_91 = arith.constant 0 : index
      %c0_92 = arith.constant 0 : index
      %172 = vector.load %arg6[%c0_91, %c0_92] : memref<13x128xf32, #tpu.memory_space<vmem>>, vector<4x128xf32>
      %cst_93 = arith.constant dense<0.000000e+00> : vector<4xf32>
      %173 = vector.multi_reduction <add>, %172, %cst_93 [1] : vector<4x128xf32> to vector<4xf32>
      %c0_94 = arith.constant 0 : index
      %c0_95 = arith.constant 0 : index
      %c0_96 = arith.constant 0 : index
      %c0_97 = arith.constant 0 : index
      %174 = vector.load %arg5[%c0_94, %c0_95, %c0_96, %c0_97] : memref<1x1x4x4xf32, #tpu.memory_space<vmem>>, vector<1x1x1x4xf32>
      %175 = vector.shape_cast %174 : vector<1x1x1x4xf32> to vector<4xf32>
      %176 = vector.shape_cast %173 : vector<4xf32> to vector<1x1x1x4xf32>
      tpu.vector_store %arg5[%c0_94, %c0_95, %c0_96, %c0_97], %176 {strides = array<i32>} : memref<1x1x4x4xf32, #tpu.memory_space<vmem>>, vector<1x1x1x4xf32>,
      %c4_98 = arith.constant 4 : index
      %c0_99 = arith.constant 0 : index
      %177 = vector.load %arg6[%c4_98, %c0_99] : memref<13x128xf32, #tpu.memory_space<vmem>>, vector<4x128xf32>
      %cst_100 = arith.constant dense<0.000000e+00> : vector<4xf32>
      %178 = vector.multi_reduction <add>, %177, %cst_100 [1] : vector<4x128xf32> to vector<4xf32>
      %c0_101 = arith.constant 0 : index
      %c0_102 = arith.constant 0 : index
      %c1_103 = arith.constant 1 : index
      %c0_104 = arith.constant 0 : index
      %179 = vector.load %arg5[%c0_101, %c0_102, %c1_103, %c0_104] : memref<1x1x4x4xf32, #tpu.memory_space<vmem>>, vector<1x1x1x4xf32>
      %180 = vector.shape_cast %179 : vector<1x1x1x4xf32> to vector<4xf32>
      %181 = vector.shape_cast %178 : vector<4xf32> to vector<1x1x1x4xf32>
      tpu.vector_store %arg5[%c0_101, %c0_102, %c1_103, %c0_104], %181 {strides = array<i32>} : memref<1x1x4x4xf32, #tpu.memory_space<vmem>>, vector<1x1x1x4xf32>,
      %c8_105 = arith.constant 8 : index
      %c0_106 = arith.constant 0 : index
      %182 = vector.load %arg6[%c8_105, %c0_106] : memref<13x128xf32, #tpu.memory_space<vmem>>, vector<4x128xf32>
      %cst_107 = arith.constant dense<0.000000e+00> : vector<4xf32>
      %183 = vector.multi_reduction <add>, %182, %cst_107 [1] : vector<4x128xf32> to vector<4xf32>
      %c0_108 = arith.constant 0 : index
      %c0_109 = arith.constant 0 : index
      %c2_110 = arith.constant 2 : index
      %c0_111 = arith.constant 0 : index
      %184 = vector.load %arg5[%c0_108, %c0_109, %c2_110, %c0_111] : memref<1x1x4x4xf32, #tpu.memory_space<vmem>>, vector<1x1x1x4xf32>
      %185 = vector.shape_cast %184 : vector<1x1x1x4xf32> to vector<4xf32>
      %186 = vector.shape_cast %183 : vector<4xf32> to vector<1x1x1x4xf32>
      tpu.vector_store %arg5[%c0_108, %c0_109, %c2_110, %c0_111], %186 {strides = array<i32>} : memref<1x1x4x4xf32, #tpu.memory_space<vmem>>, vector<1x1x1x4xf32>,
      %c12_112 = arith.constant 12 : index
      %c0_113 = arith.constant 0 : index
      %187 = vector.load %arg6[%c12_112, %c0_113] : memref<13x128xf32, #tpu.memory_space<vmem>>, vector<1x128xf32>
      %188 = vector.shape_cast %187 : vector<1x128xf32> to vector<128xf32>
      %189 = vector.shape_cast %188 : vector<128xf32> to vector<1x128xf32>
      %cst_114 = arith.constant dense<0.000000e+00> : vector<1xf32>
      %190 = vector.multi_reduction <add>, %189, %cst_114 [1] : vector<1x128xf32> to vector<1xf32>
      %191 = vector.shape_cast %190 : vector<1xf32> to vector<1x1xf32>
      %192 = vector.extract %191[0, 0] : f32 from vector<1x1xf32>
      %193 = vector.broadcast %192 : f32 to vector<4xf32>
      %c0_115 = arith.constant 0 : index
      %c0_116 = arith.constant 0 : index
      %c3_117 = arith.constant 3 : index
      %c0_118 = arith.constant 0 : index
      %194 = vector.load %arg5[%c0_115, %c0_116, %c3_117, %c0_118] : memref<1x1x4x4xf32, #tpu.memory_space<vmem>>, vector<1x1x1x4xf32>
      %195 = vector.shape_cast %194 : vector<1x1x1x4xf32> to vector<4xf32>
      %196 = vector.shape_cast %193 : vector<4xf32> to vector<1x1x1x4xf32>
      tpu.vector_store %arg5[%c0_115, %c0_116, %c3_117, %c0_118], %196 {strides = array<i32>} : memref<1x1x4x4xf32, #tpu.memory_space<vmem>>, vector<1x1x1x4xf32>,
    } else {
    }
    return
  }
  func.func @transform_0(%arg0: i32, %arg1: i32, %arg2: i32) -> (i32, i32, i32, i32) {
    %c1_i32 = arith.constant 1 : i32
    %0 = arith.muli %arg1, %c1_i32 : i32
    %1 = arith.addi %0, %arg2 : i32
    %c0_i32 = arith.constant 0 : i32
    %c0_i32_0 = arith.constant 0 : i32
    %c0_i32_1 = arith.constant 0 : i32
    return %arg0, %c0_i32, %1, %c0_i32_0 : i32, i32, i32, i32
  }
  func.func @transform_1(%arg0: i32, %arg1: i32, %arg2: i32) -> (i32, i32, i32) {
    %c1_i32 = arith.constant 1 : i32
    %0 = arith.muli %arg1, %c1_i32 : i32
    %1 = arith.addi %0, %arg2 : i32
    %c0_i32 = arith.constant 0 : i32
    %c0_i32_0 = arith.constant 0 : i32
    return %arg0, %1, %c0_i32 : i32, i32, i32
  }
  func.func @transform_2(%arg0: i32, %arg1: i32, %arg2: i32) -> (i32, i32, i32, i32) {
    %c0_i32 = arith.constant 0 : i32
    %c0_i32_0 = arith.constant 0 : i32
    %c0_i32_1 = arith.constant 0 : i32
    return %arg0, %arg1, %c0_i32, %c0_i32_0 : i32, i32, i32, i32
  }
}

</mosaic_0001>

<llo_original>
// kernel: dc_and_ce_loss.1
$region0: #{dc_and_ce_loss.1}
  #allocation0 [shape = 'u32[]', space=smem, size = 0x4, offset = 0x4, fixed_abs, tag = 'smem constant byte address 0x4 - core index']
  #allocation1 [shape = 'u32[144,128]{1,0:T(1,128)}', space=vmem, size = 0x12000, scoped, tag = 'internal scratch']
  #allocation2 [shape = 'f32[13,128]{1,0:T(8,128)}', space=vmem, size = 0x2000, scoped, tag = 'scratch operand']
  %s0 = inlined_call_operand.vmem [shape: f32[2,4,2,128], index: 0, kind: input, shape index: {}]
  %s1 = inlined_call_operand.vmem [shape: s32[2,2,128], index: 1, kind: input, shape index: {}]
  %s2 = inlined_call_operand.vmem [shape: f32[2,1,4,4], index: 2, kind: output, shape index: {}]
  %s3 = sld [smem:[#allocation0]]
  $region49: #{dc_and_ce_loss.1} parent=0
    _
  %s5 = ssub.s32 1, %s3
  %s6 = scalar_select 0, %s5, %s3
  loop: start=0, step=1, limit=4
  $region2: #{dc_and_ce_loss.1} parent=0 // loop_pre_header
    _
  $region3: #{dc_and_ce_loss.1} parent=0 // loop_header
    %s8 = sphi 0, %s12
    %p9 = scmp.ge.s32.totalorder %s8, 4
    %s15 = sphi 0, %s34
    %s16 = sphi 0, %s30
    %s17 = sphi 0, %s26
    %s18 = sphi 0, %s15
    %s19 = sphi 0, %s16
    %s20 = sphi 0, %s17
    %s21 = sphi 0, %s18
    %s22 = sphi 0, %s19
    %s23 = sphi 0, %s20
    %s41 = sphi 0, %s43
    %s44 = sphi 0, %s41
    %s45 = sphi 0, %s44
    %s61 = sphi 0, %s45
    %s71 = sphi 0, %s73
    %s74 = sphi 0, %s71
    %s75 = sphi 0, %s74
    %s91 = sphi 0, %s75
    %s99 = sphi 0, %s101
    %s102 = sphi 0, %s99
    %s103 = sphi 0, %s102
    %s119 = sphi 0, %s103
  $region4: #{dc_and_ce_loss.1} parent=0 // loop_header_branch
    %11 = sbr.rel (%p9) target = $region8
  $region5: #{dc_and_ce_loss.1} parent=0 // loop_body
    %s13 = ssub.s32 %s8, 1
    %s14 = ssub.s32 %s8, 2
    %s24 = sadd.s32 1, %s17
    %p25 = scmp.ge.s32.totalorder %s24, 1
    %s26 = scalar_select %p25, 0, %s24
    %s27 = sadd.s32 1, %s16
    %s28 = scalar_select %p25, %s27, %s16
    %p29 = scmp.ge.s32.totalorder %s28, 1
    %s30 = scalar_select %p29, 0, %s28
    %s31 = sadd.s32 1, %s15
    %s32 = scalar_select %p29, %s31, %s15
    %p33 = scmp.ge.s32.totalorder %s32, 2
    %s34 = scalar_select %p33, 0, %s32
    %s35 = sadd.s32 %s16, %s17
    %s36 = sadd.s32 %s30, %s26
    %s37 = ssub.s32 %s15, %s34
    %s38 = ssub.s32 %s35, %s36
    %s39 = sor.u32 %s37, %s38
    %p40 = scmp.eq.s32.totalorder %s39, 0
    %s42 = sadd.s32 %s41, 1
    %s43 = scalar_select %p40, %s41, %s42
    %p46 = pneg %p40
    %p47 = scmp.eq.s32.totalorder %s8, 1
    %p48 = por %p46, %p47
    %p49 = scmp.ne.s32.totalorder %s41, %s44
    %p50 = scmp.eq.s32.totalorder %s8, 0
    %p51 = por %p49, %p50
    %p52 = scmp.ne.s32.totalorder %s41, %s44
    %p53 = scmp.eq.s32.totalorder %s13, 1
    %p54 = por %p52, %p53
    %p55 = scmp.ne.s32.totalorder %s44, %s45
    %p56 = scmp.eq.s32.totalorder %s13, 0
    %p57 = por %p55, %p56
    %p58 = scmp.ne.s32.totalorder %s44, %s45
    %p59 = scmp.eq.s32.totalorder %s14, 1
    %p60 = por %p58, %p59
    %p62 = scmp.ne.s32.totalorder %s45, %s61
    %p63 = scmp.eq.s32.totalorder %s14, 0
    %p64 = por %p62, %p63
    %s65 = sadd.s32 %s16, %s17
    %s66 = sadd.s32 %s30, %s26
    %s67 = ssub.s32 %s15, %s34
    %s68 = ssub.s32 %s65, %s66
    %s69 = sor.u32 %s67, %s68
    %p70 = scmp.eq.s32.totalorder %s69, 0
    %s72 = sadd.s32 %s71, 1
    %s73 = scalar_select %p70, %s71, %s72
    %p76 = pneg %p70
    %p77 = scmp.eq.s32.totalorder %s8, 1
    %p78 = por %p76, %p77
    %p79 = scmp.ne.s32.totalorder %s71, %s74
    %p80 = scmp.eq.s32.totalorder %s8, 0
    %p81 = por %p79, %p80
    %p82 = scmp.ne.s32.totalorder %s71, %s74
    %p83 = scmp.eq.s32.totalorder %s13, 1
    %p84 = por %p82, %p83
    %p85 = scmp.ne.s32.totalorder %s74, %s75
    %p86 = scmp.eq.s32.totalorder %s13, 0
    %p87 = por %p85, %p86
    %p88 = scmp.ne.s32.totalorder %s74, %s75
    %p89 = scmp.eq.s32.totalorder %s14, 1
    %p90 = por %p88, %p89
    %p92 = scmp.ne.s32.totalorder %s75, %s91
    %p93 = scmp.eq.s32.totalorder %s14, 0
    %p94 = por %p92, %p93
    %s95 = ssub.s32 %s15, %s34
    %s96 = ssub.s32 %s16, %s30
    %s97 = sor.u32 %s95, %s96
    %p98 = scmp.eq.s32.totalorder %s97, 0
    %s100 = sadd.s32 %s99, 1
    %s101 = scalar_select %p98, %s99, %s100
    %p104 = pneg %p98
    %p105 = scmp.eq.s32.totalorder %s8, 1
    %p106 = por %p104, %p105
    %p107 = scmp.ne.s32.totalorder %s99, %s102
    %p108 = scmp.eq.s32.totalorder %s8, 0
    %p109 = por %p107, %p108
    %p110 = scmp.ne.s32.totalorder %s99, %s102
    %p111 = scmp.eq.s32.totalorder %s13, 1
    %p112 = por %p110, %p111
    %p113 = scmp.ne.s32.totalorder %s102, %s103
    %p114 = scmp.eq.s32.totalorder %s13, 0
    %p115 = por %p113, %p114
    %p116 = scmp.ne.s32.totalorder %s102, %s103
    %p117 = scmp.eq.s32.totalorder %s14, 1
    %p118 = por %p116, %p117
    %p120 = scmp.ne.s32.totalorder %s103, %s119
    %p121 = scmp.eq.s32.totalorder %s14, 0
    %p122 = por %p120, %p121
    %p123 = scmp.le.s32.totalorder 1, %s8
    %p124 = scmp.lt.s32.totalorder %s8, 3
    %p125 = pnand %p123, %p124
    %p126 = pneg %p125
    // Predicated region
    $region9: #{dc_and_ce_loss.1} parent=5 // pred_check
      _
    $region10: #{dc_and_ce_loss.1} parent=5 // pred_check_branch
      %128 = sbr.rel (%p125) target = $region12
    $region11: #{dc_and_ce_loss.1} parent=5 // pred_region
      %s129 = ssub.s32 %s8, 1
    $region12: #{dc_and_ce_loss.1} parent=5 // pred_fallthru
      _
    %p130 = scmp.lt.s32.totalorder %s8, 2
    // Predicated region
    $region13: #{dc_and_ce_loss.1} parent=5 // pred_check
      %p131 = pneg %p130
    $region14: #{dc_and_ce_loss.1} parent=5 // pred_check_branch
      %133 = sbr.rel (%p131) target = $region16
    $region15: #{dc_and_ce_loss.1} parent=5 // pred_region
      // Predicated region
      $region17: #{dc_and_ce_loss.1} parent=15 // pred_check
        %p134 = pneg %p51
      $region18: #{dc_and_ce_loss.1} parent=15 // pred_check_branch
        %136 = sbr.rel (%p134) target = $region20
      $region19: #{dc_and_ce_loss.1} parent=15 // pred_region
        %s137 = sadd.s32 %s16, %s17
        %p138 = scmp.lt.s32.totalorder %s15, 1
        %s139 = scalar_select %p138, %s15, 1
        %p140 = scmp.lt.s32.totalorder %s137, 0
        %s141 = scalar_select %p140, %s137, 0
        %s142 = smul.addr %s139, 4
        %s143 = sadd.s32 %s141, %s142
        %s144 = smul.addr %s143, 2
        %s145 = scalar_lea.vmem %s0, %s144
        %s146 = sadd.s32 %s16, %s17
      $region20: #{dc_and_ce_loss.1} parent=15 // pred_fallthru
        _
      // Predicated region
      $region21: #{dc_and_ce_loss.1} parent=15 // pred_check
        %p147 = pneg %p81
      $region22: #{dc_and_ce_loss.1} parent=15 // pred_check_branch
        %149 = sbr.rel (%p147) target = $region24
      $region23: #{dc_and_ce_loss.1} parent=15 // pred_region
        %s150 = sadd.s32 %s16, %s17
        %p151 = scmp.lt.s32.totalorder %s15, 1
        %s152 = scalar_select %p151, %s15, 1
        %p153 = scmp.lt.s32.totalorder %s150, 0
        %s154 = scalar_select %p153, %s150, 0
        %s155 = sadd.s32 %s154, %s152
        %s156 = smul.addr %s155, 2
        %s157 = scalar_lea.vmem %s1, %s156
        %s158 = sadd.s32 %s16, %s17
      $region24: #{dc_and_ce_loss.1} parent=15 // pred_fallthru
        _
    $region16: #{dc_and_ce_loss.1} parent=5 // pred_fallthru
      _
    %p159 = scmp.le.s32.totalorder 1, %s8
    %p160 = scmp.lt.s32.totalorder %s8, 3
    %p161 = pnand %p159, %p160
    %p162 = pneg %p161
    // Predicated region
    $region25: #{dc_and_ce_loss.1} parent=5 // pred_check
      _
    $region26: #{dc_and_ce_loss.1} parent=5 // pred_check_branch
      %164 = sbr.rel (%p161) target = $region28
    $region27: #{dc_and_ce_loss.1} parent=5 // pred_region
      %s165 = ssub.s32 %s8, 1
      %s166 = sadd.s32 %s19, %s20
      %p167 = scmp.lt.s32.totalorder %s18, 1
      %s168 = scalar_select %p167, %s18, 1
      %p169 = scmp.lt.s32.totalorder %s166, 0
      %s170 = scalar_select %p169, %s166, 0
      %s171 = smul.addr %s168, 4
      %s172 = sadd.s32 %s170, %s171
      %s173 = smul.addr %s172, 2
      %s174 = scalar_lea.vmem %s0, %s173
      %p175 = pneg %p57
      %p176 = pneg %p54
      %s177 = sadd.s32 %s19, %s20
      %p178 = scmp.lt.s32.totalorder %s18, 1
      %s179 = scalar_select %p178, %s18, 1
      %p180 = scmp.lt.s32.totalorder %s177, 0
      %s181 = scalar_select %p180, %s177, 0
      %s182 = sadd.s32 %s181, %s179
      %s183 = smul.addr %s182, 2
      %s184 = scalar_lea.vmem %s1, %s183
      %p185 = pneg %p87
      %p186 = pneg %p84
      %p187 = pneg %p115
      %p188 = pneg %p112
      %p189 = scmp.lt.s32.totalorder %s18, 1
      %s190 = scalar_select %p189, %s18, 1
      %p191 = scmp.lt.s32.totalorder %s19, 0
      %s192 = scalar_select %p191, %s19, 0
      %s193 = sadd.s32 %s192, %s190
      %s194 = smul.addr %s193, 4
      %s195 = scalar_lea.vmem %s2, %s194
      %s196 = sadd.s32 %s19, %s20
      %p197 = scmp.lt.s32.totalorder %s18, 1
      %s198 = scalar_select %p197, %s18, 1
      %p199 = scmp.lt.s32.totalorder %s196, 0
      %s200 = scalar_select %p199, %s196, 0
      %s201 = smul.addr %s198, 4
      %s202 = sadd.s32 %s200, %s201
      %s203 = smul.addr %s202, 2
      %s204 = scalar_lea.vmem %s0, %s203
      %s205 = sadd.s32 %s19, %s20
      %s206 = sadd.s32 %s19, %s20
      %p207 = scmp.lt.s32.totalorder %s18, 1
      %s208 = scalar_select %p207, %s18, 1
      %p209 = scmp.lt.s32.totalorder %s206, 0
      %s210 = scalar_select %p209, %s206, 0
      %s211 = sadd.s32 %s210, %s208
      %s212 = smul.addr %s211, 2
      %s213 = scalar_lea.vmem %s1, %s212
      %s214 = sadd.s32 %s19, %s20
      %p215 = scmp.lt.s32.totalorder %s18, 1
      %s216 = scalar_select %p215, %s18, 1
      %p217 = scmp.lt.s32.totalorder %s19, 0
      %s218 = scalar_select %p217, %s19, 0
      %s219 = sadd.s32 %s218, %s216
      %s220 = smul.addr %s219, 4
      %s221 = scalar_lea.vmem %s2, %s220
      %p222 = scmp.eq.s32.totalorder %s20, 0
      // Predicated region
      $region29: #{dc_and_ce_loss.1} parent=27 // pred_check
        %p223 = pneg %p222
      $region30: #{dc_and_ce_loss.1} parent=27 // pred_check_branch
        %225 = sbr.rel (%p223) target = $region32
      $region31: #{dc_and_ce_loss.1} parent=27 // pred_region
        %226 = vst [vmem:[#allocation2] sm:$0xff] 0.0
        %227 = vst [vmem:[#allocation2 + $0x8] sm:$0x1f] 0.0
      $region32: #{dc_and_ce_loss.1} parent=27 // pred_fallthru
        _
      %v228 = vld [vmem:[%s213] sm:$0x3]
      %v229 = vld [vmem:[%s204] sm:$0x3]
      %s230 = scalar_lea.vmem %s204, 2
      %v231 = vld [vmem:[%s230] sm:$0x3]
      %s232 = scalar_lea.vmem %s204, 4
      %v233 = vld [vmem:[%s232] sm:$0x3]
      %s234 = scalar_lea.vmem %s204, 6
      %v235 = vld [vmem:[%s234] sm:$0x3]
      %v236 = vmax.f32 %v229, %v231
      %v237 = vmax.f32 %v236, %v233
      %v238 = vmax.f32 %v237, %v235
      %v239 = vsub.f32 %v229, %v238
      %v240 = vmul.f32 %v239, 1.442695
      %v241 = vpow.pop %v240
      %v242 = vsub.f32 %v231, %v238
      %v243 = vmul.f32 %v242, 1.442695
      %v244 = vpow.pop %v243
      %v245 = vsub.f32 %v233, %v238
      %v246 = vmul.f32 %v245, 1.442695
      %v247 = vpow.pop %v246
      %v248 = vsub.f32 %v235, %v238
      %v249 = vmul.f32 %v248, 1.442695
      %v250 = vpow.pop %v249
      %v251 = vadd.f32 %v241, %v244
      %v252 = vadd.f32 %v251, %v247
      %v253 = vadd.f32 %v252, %v250
      %v254 = vrcp.pop %v253
      %v255 = vmul.f32 %v253, %v254
      %v256 = vsub.f32 2.0, %v255
      %v257 = vmul.f32 %v254, %v256
      %v258 = vlog2.pop %v253
      %v259 = vmul.f32 %v258, 0.6931472
      %v260 = vadd.f32 %v238, %v259
      %vm261 = vcmp.eq.s32.totalorder %v228, 0
      %v262 = vmul.f32 %v241, %v257
      %v263 = vld [vmem:[#allocation2] sm:$0x1]
      %v264 = vsel %vm261, %v262, 0.0
      %vm265 = vcmask 1041408
      %v266 = vsel %vm265, %v264, 0.0
      %v267 = vrot.slane %v266, 4
      %v268 = vadd.f32 %v266, %v267
      %v269 = vrot.slane %v268, 2
      %v270 = vadd.f32 %v268, %v269
      %v271 = vrot.slane %v270, 1
      %v272 = vadd.f32 %v270, %v271
      %v273 = vadd.f32 %v263, %v272
      %274 = vst [vmem:[#allocation2] sm:$0x1] %v273
      %v275 = vld [vmem:[#allocation2 + $0x4] sm:$0x1]
      %v276 = vsel %vm265, %v262, 0.0
      %v277 = vrot.slane %v276, 4
      %v278 = vadd.f32 %v276, %v277
      %v279 = vrot.slane %v278, 2
      %v280 = vadd.f32 %v278, %v279
      %v281 = vrot.slane %v280, 1
      %v282 = vadd.f32 %v280, %v281
      %v283 = vadd.f32 %v275, %v282
      %284 = vst [vmem:[#allocation2 + $0x4] sm:$0x1] %v283
      %v285 = vld [vmem:[#allocation2 + $0x8] sm:$0x1]
      %v286 = vsel %vm261, 1.0, 0.0
      %v287 = vsel %vm265, %v286, 0.0
      %v288 = vrot.slane %v287, 4
      %v289 = vadd.f32 %v287, %v288
      %v290 = vrot.slane %v289, 2
      %v291 = vadd.f32 %v289, %v290
      %v292 = vrot.slane %v291, 1
      %v293 = vadd.f32 %v291, %v292
      %v294 = vadd.f32 %v285, %v293
      %295 = vst [vmem:[#allocation2 + $0x8] sm:$0x1] %v294
      %v296 = vsel %vm261, %v229, 0.0
      %vm297 = vcmp.eq.s32.totalorder %v228, 1
      %v298 = vmul.f32 %v244, %v257
      %v299 = vld [vmem:[#allocation2 + $0x1] sm:$0x1]
      %v300 = vsel %vm297, %v298, 0.0
      %v301 = vsel %vm265, %v300, 0.0
      %v302 = vrot.slane %v301, 4
      %v303 = vadd.f32 %v301, %v302
      %v304 = vrot.slane %v303, 2
      %v305 = vadd.f32 %v303, %v304
      %v306 = vrot.slane %v305, 1
      %v307 = vadd.f32 %v305, %v306
      %v308 = vadd.f32 %v299, %v307
      %309 = vst [vmem:[#allocation2 + $0x1] sm:$0x1] %v308
      %v310 = vld [vmem:[#allocation2 + $0x5] sm:$0x1]
      %v311 = vsel %vm265, %v298, 0.0
      %v312 = vrot.slane %v311, 4
      %v313 = vadd.f32 %v311, %v312
      %v314 = vrot.slane %v313, 2
      %v315 = vadd.f32 %v313, %v314
      %v316 = vrot.slane %v315, 1
      %v317 = vadd.f32 %v315, %v316
      %v318 = vadd.f32 %v310, %v317
      %319 = vst [vmem:[#allocation2 + $0x5] sm:$0x1] %v318
      %v320 = vld [vmem:[#allocation2 + $0x9] sm:$0x1]
      %v321 = vsel %vm297, 1.0, 0.0
      %v322 = vsel %vm265, %v321, 0.0
      %v323 = vrot.slane %v322, 4
      %v324 = vadd.f32 %v322, %v323
      %v325 = vrot.slane %v324, 2
      %v326 = vadd.f32 %v324, %v325
      %v327 = vrot.slane %v326, 1
      %v328 = vadd.f32 %v326, %v327
      %v329 = vadd.f32 %v320, %v328
      %330 = vst [vmem:[#allocation2 + $0x9] sm:$0x1] %v329
      %v331 = vsel %vm297, %v231, 0.0
      %v332 = vadd.f32 %v296, %v331
      %vm333 = vcmp.eq.s32.totalorder %v228, 2
      %v334 = vmul.f32 %v247, %v257
      %v335 = vld [vmem:[#allocation2 + $0x2] sm:$0x1]
      %v336 = vsel %vm333, %v334, 0.0
      %v337 = vsel %vm265, %v336, 0.0
      %v338 = vrot.slane %v337, 4
      %v339 = vadd.f32 %v337, %v338
      %v340 = vrot.slane %v339, 2
      %v341 = vadd.f32 %v339, %v340
      %v342 = vrot.slane %v341, 1
      %v343 = vadd.f32 %v341, %v342
      %v344 = vadd.f32 %v335, %v343
      %345 = vst [vmem:[#allocation2 + $0x2] sm:$0x1] %v344
      %v346 = vld [vmem:[#allocation2 + $0x6] sm:$0x1]
      %v347 = vsel %vm265, %v334, 0.0
      %v348 = vrot.slane %v347, 4
      %v349 = vadd.f32 %v347, %v348
      %v350 = vrot.slane %v349, 2
      %v351 = vadd.f32 %v349, %v350
      %v352 = vrot.slane %v351, 1
      %v353 = vadd.f32 %v351, %v352
      %v354 = vadd.f32 %v346, %v353
      %355 = vst [vmem:[#allocation2 + $0x6] sm:$0x1] %v354
      %v356 = vld [vmem:[#allocation2 + $0xa] sm:$0x1]
      %v357 = vsel %vm333, 1.0, 0.0
      %v358 = vsel %vm265, %v357, 0.0
      %v359 = vrot.slane %v358, 4
      %v360 = vadd.f32 %v358, %v359
      %v361 = vrot.slane %v360, 2
      %v362 = vadd.f32 %v360, %v361
      %v363 = vrot.slane %v362, 1
      %v364 = vadd.f32 %v362, %v363
      %v365 = vadd.f32 %v356, %v364
      %366 = vst [vmem:[#allocation2 + $0xa] sm:$0x1] %v365
      %v367 = vsel %vm333, %v233, 0.0
      %v368 = vadd.f32 %v332, %v367
      %vm369 = vcmp.eq.s32.totalorder %v228, 3
      %v370 = vmul.f32 %v250, %v257
      %v371 = vld [vmem:[#allocation2 + $0x3] sm:$0x1]
      %v372 = vsel %vm369, %v370, 0.0
      %v373 = vsel %vm265, %v372, 0.0
      %v374 = vrot.slane %v373, 4
      %v375 = vadd.f32 %v373, %v374
      %v376 = vrot.slane %v375, 2
      %v377 = vadd.f32 %v375, %v376
      %v378 = vrot.slane %v377, 1
      %v379 = vadd.f32 %v377, %v378
      %v380 = vadd.f32 %v371, %v379
      %381 = vst [vmem:[#allocation2 + $0x3] sm:$0x1] %v380
      %v382 = vld [vmem:[#allocation2 + $0x7] sm:$0x1]
      %v383 = vsel %vm265, %v370, 0.0
      %v384 = vrot.slane %v383, 4
      %v385 = vadd.f32 %v383, %v384
      %v386 = vrot.slane %v385, 2
      %v387 = vadd.f32 %v385, %v386
      %v388 = vrot.slane %v387, 1
      %v389 = vadd.f32 %v387, %v388
      %v390 = vadd.f32 %v382, %v389
      %391 = vst [vmem:[#allocation2 + $0x7] sm:$0x1] %v390
      %v392 = vld [vmem:[#allocation2 + $0xb] sm:$0x1]
      %v393 = vsel %vm369, 1.0, 0.0
      %v394 = vsel %vm265, %v393, 0.0
      %v395 = vrot.slane %v394, 4
      %v396 = vadd.f32 %v394, %v395
      %v397 = vrot.slane %v396, 2
      %v398 = vadd.f32 %v396, %v397
      %v399 = vrot.slane %v398, 1
      %v400 = vadd.f32 %v398, %v399
      %v401 = vadd.f32 %v392, %v400
      %402 = vst [vmem:[#allocation2 + $0xb] sm:$0x1] %v401
      %v403 = vsel %vm369, %v235, 0.0
      %v404 = vadd.f32 %v368, %v403
      %v405 = vld [vmem:[#allocation2 + $0xc] sm:$0x1]
      %v406 = vsub.f32 %v260, %v404
      %v407 = vsel %vm265, %v406, 0.0
      %v408 = vrot.slane %v407, 4
      %v409 = vadd.f32 %v407, %v408
      %v410 = vrot.slane %v409, 2
      %v411 = vadd.f32 %v409, %v410
      %v412 = vrot.slane %v411, 1
      %v413 = vadd.f32 %v411, %v412
      %v414 = vadd.f32 %v405, %v413
      %415 = vst [vmem:[#allocation2 + $0xc] sm:$0x1] %v414
      // Predicated region
      $region33: #{dc_and_ce_loss.1} parent=27 // pred_check
        %p416 = pneg %p222
      $region34: #{dc_and_ce_loss.1} parent=27 // pred_check_branch
        %418 = sbr.rel (%p416) target = $region36
      $region35: #{dc_and_ce_loss.1} parent=27 // pred_region
        %v419 = vld [vmem:[#allocation2] sm:$0xf]
        %vm420 = vcmask 1043456
        %v421 = vsel %vm420, %v419, 0.0
        %422 = vadd.xlane.f32.xlu0 %v421
        %v423 = vpop.xlane.xlu0 %422
        %v425 = vlaneseq
        %v426 = vand.u32 %v425, 127
        %v427 = vlaneseq
        %v428 = vshrl.u32 %v427, 7
        %v429 = vsub.s32 %v426, %v428
        %v430 = vrot.slane %v423, %v429
        %vm432 = vcmask 24576
        %433 = vst.msk [vmem:[%s221] sm:$0x1] %vm432, %v430
        %v434 = vld [vmem:[#allocation2 + $0x4] sm:$0xf]
        %v435 = vsel %vm420, %v434, 0.0
        %436 = vadd.xlane.f32.xlu0 %v435
        %v437 = vpop.xlane.xlu0 %436
        %v439 = vlaneseq
        %v440 = vshrl.u32 %v439, 7
        %v441 = vsub.s32 %v426, %v440
        %v442 = vrot.slane %v437, %v441
        %444 = vst.msk [vmem:[%s221 + $0x1] sm:$0x1] %vm432, %v442
        %v445 = vld [vmem:[#allocation2 + $0x8] sm:$0xf]
        %v446 = vsel %vm420, %v445, 0.0
        %447 = vadd.xlane.f32.xlu0 %v446
        %v448 = vpop.xlane.xlu0 %447
        %v450 = vlaneseq
        %v451 = vshrl.u32 %v450, 7
        %v452 = vsub.s32 %v426, %v451
        %v453 = vrot.slane %v448, %v452
        %455 = vst.msk [vmem:[%s221 + $0x2] sm:$0x1] %vm432, %v453
        %v456 = vld [vmem:[#allocation2 + $0xc] sm:$0x1]
        %vm457 = vcmask 1040384
        %v458 = vsel %vm457, %v456, 0.0
        %459 = vadd.xlane.f32.xlu0 %v458
        %v460 = vpop.xlane.xlu0 %459
        %s461 = vtos %v460
        %v462 = vstv %s461
        %463 = vst.msk [vmem:[%s221 + $0x3] sm:$0x1] %vm432, %v462
      $region36: #{dc_and_ce_loss.1} parent=27 // pred_fallthru
        _
      %p464 = scmp.lt.s32.totalorder %s18, 1
      %s465 = scalar_select %p464, %s18, 1
      %p466 = scmp.lt.s32.totalorder %s19, 0
      %s467 = scalar_select %p466, %s19, 0
      %s468 = sadd.s32 %s467, %s465
      %s469 = smul.addr %s468, 4
      %s470 = scalar_lea.vmem %s2, %s469
      // Predicated region
      $region37: #{dc_and_ce_loss.1} parent=27 // pred_check
        %p471 = pneg %p112
      $region38: #{dc_and_ce_loss.1} parent=27 // pred_check_branch
        %473 = sbr.rel (%p471) target = $region40
      $region39: #{dc_and_ce_loss.1} parent=27 // pred_region
        _
      $region40: #{dc_and_ce_loss.1} parent=27 // pred_fallthru
        _
    $region28: #{dc_and_ce_loss.1} parent=5 // pred_fallthru
      _
    %p474 = scmp.le.s32.totalorder 2, %s8
    // Predicated region
    $region41: #{dc_and_ce_loss.1} parent=5 // pred_check
      %p475 = pneg %p474
    $region42: #{dc_and_ce_loss.1} parent=5 // pred_check_branch
      %477 = sbr.rel (%p475) target = $region44
    $region43: #{dc_and_ce_loss.1} parent=5 // pred_region
      %s478 = ssub.s32 %s8, 2
      // Predicated region
      $region45: #{dc_and_ce_loss.1} parent=43 // pred_check
        %p479 = pneg %p118
      $region46: #{dc_and_ce_loss.1} parent=43 // pred_check_branch
        %481 = sbr.rel (%p479) target = $region48
      $region47: #{dc_and_ce_loss.1} parent=43 // pred_region
        %p482 = scmp.lt.s32.totalorder %s21, 1
        %s483 = scalar_select %p482, %s21, 1
        %p484 = scmp.lt.s32.totalorder %s22, 0
        %s485 = scalar_select %p484, %s22, 0
        %s486 = sadd.s32 %s485, %s483
        %s487 = smul.addr %s486, 4
        %s488 = scalar_lea.vmem %s2, %s487
      $region48: #{dc_and_ce_loss.1} parent=43 // pred_fallthru
        _
    $region44: #{dc_and_ce_loss.1} parent=5 // pred_fallthru
      _
  $region6: #{dc_and_ce_loss.1} parent=0 // loop_footer
    %s12 = sadd.s32 1, %s8
  $region7: #{dc_and_ce_loss.1} parent=0 // loop_footer_branch
    %7 = sbr.rel target = $region3
  $region8: #{dc_and_ce_loss.1} parent=0 // loop_exit
    _

</llo_original>
